<compile_context>
chip_gen: v7x
topology: tpu7x:2x2x1
jax: 0.10.0
libtpu: 0.0.40
codegen_flags: <defaults>
</compile_context>

<pallas_src>
import functools

import jax
import jax.numpy as jnp
from jax import lax
from jax.experimental import pallas as pl
from jax.experimental.pallas import tpu as pltpu

TAU = 0.2   # unused in forward (kept for parity with the module's attributes)
MRG = 0.5   # unused in forward
ALPHA = 1.0
BETA = 5.0


def _ms_loss_kernel(x_row_ref, x_full_ref, ycol_ref, yrow_ref, out_ref, *,
                    alpha, beta):
    i = pl.program_id(0)
    tm = x_row_ref.shape[0]
    b = x_full_ref.shape[0]

    # Similarity tile: (tm, B) = X_rows @ X^T, contracting dim 1 of both
    # operands (no materialized transpose), f32 accumulate on the MXU.
    logits = lax.dot_general(
        x_row_ref[...], x_full_ref[...],
        dimension_numbers=(((1,), (1,)), ((), ())),
        preferred_element_type=jnp.float32)                      # (tm, B) f32

    # Off-diagonal mean of the FULL similarity matrix, analytically from X:
    #   sum(logits) = colsum . colsum ,  trace(logits) = sum(x * x)
    xf = x_full_ref[...].astype(jnp.float32)
    colsum = jnp.sum(xf, axis=0)                                  # (D,)
    sum_all = jnp.sum(colsum * colsum)
    trace = jnp.sum(xf * xf)
    mean_logit = (sum_all - trace) * (1.0 / (b * (b - 1)))

    # Boolean masks (no float mask tensors, no materialized neg_mask).
    class_eq = ycol_ref[...] == yrow_ref[...]                     # (tm, B) bool
    row_ids = i * tm + lax.broadcasted_iota(jnp.int32, (tm, b), 0)
    col_ids = lax.broadcasted_iota(jnp.int32, (tm, b), 1)
    is_self = row_ids == col_ids

    centered = logits - mean_logit
    pos_sum = jnp.sum(
        jnp.where(jnp.logical_and(class_eq, jnp.logical_not(is_self)),
                  jnp.exp(-alpha * centered), 0.0),
        axis=1, keepdims=True)                                    # (tm, 1)
    neg_sum = jnp.sum(
        jnp.where(jnp.logical_not(class_eq),
                  jnp.exp(beta * centered), 0.0),
        axis=1, keepdims=True)                                    # (tm, 1)

    out_ref[...] = ((1.0 / alpha) * jnp.log1p(pos_sum)
                    + (1.0 / beta) * jnp.log1p(neg_sum))


def _pick_row_tile(B):
    # 256-multiples feed the v6e/v7x 256x256 MXU; 128 works on v5e.
    for t in (512, 256, 128):
        if B % t == 0:
            return t
    return B  # small / odd batches: single row tile


def ms_loss(X, y, *, alpha=ALPHA, beta=BETA):
    """X: (B, D) float (f32 or bf16), y: (B,) int labels. Scalar f32 loss."""
    B, D = X.shape
    if y.shape[0] != B:
        raise ValueError("Num of labels does not match num of features")
    y = y.astype(jnp.int32)
    y_col = y.reshape(B, 1)
    y_row = y.reshape(1, B)

    tm = _pick_row_tile(B)
    n_tiles = B // tm
    isz = X.dtype.itemsize

    # VMEM sized to the actual resident buffers (+ generous in-kernel slack).
    est = 4 * (2 * tm * D * isz + 2 * B * D * isz + 8 * tm * B * 4) + (2 << 20)
    vmem_limit = int(min(max(est, 8 << 20), 48 << 20))

    kernel = functools.partial(_ms_loss_kernel, alpha=float(alpha),
                               beta=float(beta))
    per_row = pl.pallas_call(
        kernel,
        grid=(n_tiles,),
        in_specs=[
            pl.BlockSpec((tm, D), lambda i: (i, 0)),   # row tile of X
            pl.BlockSpec((B, D), lambda i: (0, 0)),    # full X, resident
            pl.BlockSpec((tm, 1), lambda i: (i, 0)),   # labels as column
            pl.BlockSpec((1, B), lambda i: (0, 0)),    # labels as row, resident
        ],
        out_specs=pl.BlockSpec((tm, 1), lambda i: (i, 0)),
        out_shape=jax.ShapeDtypeStruct((B, 1), jnp.float32),
        compiler_params=pltpu.CompilerParams(
            dimension_semantics=("parallel",),
            vmem_limit_bytes=vmem_limit),
        cost_estimate=pl.CostEstimate(
            flops=2 * B * B * D,
            transcendentals=2 * B * B,
            bytes_accessed=2 * B * D * isz + 12 * B),
    )(X, X, y_col, y_row)
    return jnp.mean(per_row)


def ms_loss_ref(X, y, *, alpha=ALPHA, beta=BETA):
    """Pure-JAX reference mirroring the PyTorch forward."""
    B = X.shape[0]
    Xf = X.astype(jnp.float32)
    labels = y.reshape(-1, 1)
    class_eq = (labels == labels.T).astype(jnp.float32)
    eye = jnp.eye(B, dtype=jnp.float32)
    pos_mask = class_eq * (1.0 - eye)
    neg_mask = 1.0 - class_eq
    logits = Xf @ Xf.T
    mean_logit = jnp.sum(logits * (1.0 - eye)) / (B * B - B)
    pos_exp = jnp.exp(-alpha * (logits - mean_logit)) * pos_mask
    neg_exp = jnp.exp(beta * (logits - mean_logit)) * neg_mask
    pos_loss = (1.0 / alpha) * jnp.log(1.0 + jnp.sum(pos_exp, axis=1))
    neg_loss = (1.0 / beta) * jnp.log(1.0 + jnp.sum(neg_exp, axis=1))
    return jnp.mean(pos_loss + neg_loss)


if __name__ == "__main__":
    key = jax.random.PRNGKey(0)
    kx, ky = jax.random.split(key)
    B, D = 8, 32
    X = jax.random.normal(kx, (B, D), dtype=jnp.float32)
    # MS loss is normally fed L2-normalized embeddings (cosine similarity).
    # With raw random features exp(beta * logits) overflows f32 in the
    # PyTorch module and any faithful port (this caused the previous
    # non-finite result), so the test uses unit-norm rows. The kernel itself
    # does not normalize -- forward semantics match the module.
    X = X / jnp.linalg.norm(X, axis=1, keepdims=True)
    y = jax.random.randint(ky, (B,), 0, 3, dtype=jnp.int32)

    loss = jax.block_until_ready(ms_loss(X, y))
    ref = jax.block_until_ready(ms_loss_ref(X, y))

    assert jnp.isfinite(loss), f"loss not finite: {loss}"
    assert abs(float(loss) - float(ref)) <= 1e-4 * max(1.0, abs(float(ref))), (
        float(loss), float(ref))
    print("KERNEL_OK")
</pallas_src>

<mosaic_0001>
module attributes {stable_mosaic.version = 11 : i64} {
  func.func @_ms_loss_kernel(%arg0: i32, %arg1: memref<8x32xf32, #tpu.memory_space<vmem>>, %arg2: memref<8x32xf32, #tpu.memory_space<vmem>>, %arg3: memref<8x1xi32, #tpu.memory_space<vmem>>, %arg4: memref<1x8xi32, #tpu.memory_space<vmem>>, %arg5: memref<8x1xf32, #tpu.memory_space<vmem>>) attributes {dimension_semantics = [#tpu.dimension_semantics<parallel>], iteration_bounds = array<i64: 1>, scalar_prefetch = 0 : i64, scratch_operands = 0 : i64, tpu.core_type = #tpu.core_type<tc>, window_params = [{transform_indices = @transform_0, window_bounds = array<i64: 8, 32>}, {pipeline_mode = #tpu.pipeline_mode<synchronous>, transform_indices = @transform_1, window_bounds = array<i64: 8, 32>}, {transform_indices = @transform_2, window_bounds = array<i64: 8, 1>}, {pipeline_mode = #tpu.pipeline_mode<synchronous>, transform_indices = @transform_3, window_bounds = array<i64: 1, 8>}, {transform_indices = @transform_4, window_bounds = array<i64: 8, 1>}]} {
    %c0 = arith.constant 0 : index
    %c0_0 = arith.constant 0 : index
    %0 = vector.load %arg1[%c0, %c0_0] : memref<8x32xf32, #tpu.memory_space<vmem>>, vector<8x32xf32>
    %c0_1 = arith.constant 0 : index
    %c0_2 = arith.constant 0 : index
    %1 = vector.load %arg2[%c0_1, %c0_2] : memref<8x32xf32, #tpu.memory_space<vmem>>, vector<8x32xf32>
    %cst = arith.constant dense<0.000000e+00> : vector<8x8xf32>
    %2 = tpu.matmul %0, %1, %cst {dimension_numbers = #tpu.dot_dimension_numbers<[1], [1], [0], [0], [0, 0, 1, 0], [], []>} : vector<8x32xf32>, vector<8x32xf32>, vector<8x8xf32> -> vector<8x8xf32>
    %c0_3 = arith.constant 0 : index
    %c0_4 = arith.constant 0 : index
    %3 = vector.load %arg2[%c0_3, %c0_4] : memref<8x32xf32, #tpu.memory_space<vmem>>, vector<8x32xf32>
    %cst_5 = arith.constant dense<0.000000e+00> : vector<32xf32>
    %4 = vector.multi_reduction <add>, %3, %cst_5 [0] : vector<8x32xf32> to vector<32xf32>
    %5 = arith.mulf %4, %4 : vector<32xf32>
    %6 = vector.shape_cast %5 : vector<32xf32> to vector<1x32xf32>
    %cst_6 = arith.constant dense<0.000000e+00> : vector<1xf32>
    %7 = vector.multi_reduction <add>, %6, %cst_6 [1] : vector<1x32xf32> to vector<1xf32>
    %8 = vector.shape_cast %7 : vector<1xf32> to vector<1x1xf32>
    %9 = vector.extract %8[0, 0] : f32 from vector<1x1xf32>
    %10 = arith.mulf %3, %3 : vector<8x32xf32>
    %11 = vector.shape_cast %10 : vector<8x32xf32> to vector<1x8x32xf32>
    %cst_7 = arith.constant dense<0.000000e+00> : vector<1xf32>
    %12 = vector.multi_reduction <add>, %11, %cst_7 [1, 2] : vector<1x8x32xf32> to vector<1xf32>
    %13 = vector.shape_cast %12 : vector<1xf32> to vector<1x1x1xf32>
    %14 = vector.extract %13[0, 0, 0] : f32 from vector<1x1x1xf32>
    %15 = arith.subf %9, %14 : f32
    %cst_8 = arith.constant 0.0178571437 : f32
    %16 = arith.mulf %15, %cst_8 : f32
    %c0_9 = arith.constant 0 : index
    %c0_10 = arith.constant 0 : index
    %17 = vector.load %arg3[%c0_9, %c0_10] : memref<8x1xi32, #tpu.memory_space<vmem>>, vector<8x1xi32>
    %c0_11 = arith.constant 0 : index
    %c0_12 = arith.constant 0 : index
    %18 = vector.load %arg4[%c0_11, %c0_12] : memref<1x8xi32, #tpu.memory_space<vmem>>, vector<1x8xi32>
    %19 = vector.broadcast %17 : vector<8x1xi32> to vector<8x8xi32>
    %20 = vector.broadcast %18 : vector<1x8xi32> to vector<8x8xi32>
    %21 = arith.cmpi eq, %19, %20 : vector<8x8xi32>
    %c8_i32 = arith.constant 8 : i32
    %22 = arith.muli %arg0, %c8_i32 : i32
    %23 = tpu.iota {dimensions = array<i32: 0>} : vector<8x8xi32>
    %24 = vector.broadcast %22 : i32 to vector<8x8xi32>
    %25 = arith.addi %24, %23 : vector<8x8xi32>
    %26 = tpu.iota {dimensions = array<i32: 1>} : vector<8x8xi32>
    %27 = arith.cmpi eq, %25, %26 : vector<8x8xi32>
    %28 = vector.broadcast %16 : f32 to vector<8x8xf32>
    %29 = arith.subf %2, %28 : vector<8x8xf32>
    %cst_13 = arith.constant dense<true> : vector<8x8xi1>
    %30 = arith.xori %27, %cst_13 : vector<8x8xi1>
    %31 = arith.andi %21, %30 : vector<8x8xi1>
    %cst_14 = arith.constant -1.000000e+00 : f32
    %32 = vector.broadcast %cst_14 : f32 to vector<8x8xf32>
    %33 = arith.mulf %32, %29 : vector<8x8xf32>
    %34 = math.exp %33 : vector<8x8xf32>
    %cst_15 = arith.constant 0.000000e+00 : f32
    %35 = vector.broadcast %cst_15 : f32 to vector<8x8xf32>
    %36 = arith.select %31, %34, %35 : vector<8x8xi1>, vector<8x8xf32>
    %cst_16 = arith.constant dense<0.000000e+00> : vector<8xf32>
    %37 = vector.multi_reduction <add>, %36, %cst_16 [1] : vector<8x8xf32> to vector<8xf32>
    %38 = vector.shape_cast %37 : vector<8xf32> to vector<8x1xf32>
    %cst_17 = arith.constant dense<true> : vector<8x8xi1>
    %39 = arith.xori %21, %cst_17 : vector<8x8xi1>
    %cst_18 = arith.constant 5.000000e+00 : f32
    %40 = vector.broadcast %cst_18 : f32 to vector<8x8xf32>
    %41 = arith.mulf %40, %29 : vector<8x8xf32>
    %42 = math.exp %41 : vector<8x8xf32>
    %cst_19 = arith.constant 0.000000e+00 : f32
    %43 = vector.broadcast %cst_19 : f32 to vector<8x8xf32>
    %44 = arith.select %39, %42, %43 : vector<8x8xi1>, vector<8x8xf32>
    %cst_20 = arith.constant dense<0.000000e+00> : vector<8xf32>
    %45 = vector.multi_reduction <add>, %44, %cst_20 [1] : vector<8x8xf32> to vector<8xf32>
    %46 = vector.shape_cast %45 : vector<8xf32> to vector<8x1xf32>
    %47 = math.log1p %38 : vector<8x1xf32>
    %cst_21 = arith.constant 1.000000e+00 : f32
    %48 = vector.broadcast %cst_21 : f32 to vector<8x1xf32>
    %49 = arith.mulf %48, %47 : vector<8x1xf32>
    %50 = math.log1p %46 : vector<8x1xf32>
    %cst_22 = arith.constant 2.000000e-01 : f32
    %51 = vector.broadcast %cst_22 : f32 to vector<8x1xf32>
    %52 = arith.mulf %51, %50 : vector<8x1xf32>
    %53 = arith.addf %49, %52 : vector<8x1xf32>
    %c0_23 = arith.constant 0 : index
    %c0_24 = arith.constant 0 : index
    %54 = vector.load %arg5[%c0_23, %c0_24] : memref<8x1xf32, #tpu.memory_space<vmem>>, vector<8x1xf32>
    tpu.vector_store %arg5[%c0_23, %c0_24], %53 {strides = array<i32>} : memref<8x1xf32, #tpu.memory_space<vmem>>, vector<8x1xf32>,
    return
  }
  func.func @transform_0(%arg0: i32) -> (i32, i32) {
    %c0_i32 = arith.constant 0 : i32
    %c0_i32_0 = arith.constant 0 : i32
    return %arg0, %c0_i32 : i32, i32
  }
  func.func @transform_1(%arg0: i32) -> (i32, i32) {
    %c0_i32 = arith.constant 0 : i32
    %c0_i32_0 = arith.constant 0 : i32
    %c0_i32_1 = arith.constant 0 : i32
    return %c0_i32, %c0_i32_0 : i32, i32
  }
  func.func @transform_2(%arg0: i32) -> (i32, i32) {
    %c0_i32 = arith.constant 0 : i32
    %c0_i32_0 = arith.constant 0 : i32
    return %arg0, %c0_i32 : i32, i32
  }
  func.func @transform_3(%arg0: i32) -> (i32, i32) {
    %c0_i32 = arith.constant 0 : i32
    %c0_i32_0 = arith.constant 0 : i32
    %c0_i32_1 = arith.constant 0 : i32
    return %c0_i32, %c0_i32_0 : i32, i32
  }
  func.func @transform_4(%arg0: i32) -> (i32, i32) {
    %c0_i32 = arith.constant 0 : i32
    %c0_i32_0 = arith.constant 0 : i32
    return %arg0, %c0_i32 : i32, i32
  }
}

</mosaic_0001>

<llo_original>
// kernel: tpu_custom_call.1
$region0: #{tpu_custom_call.1}
  #allocation0 [shape = 'u32[]', space=smem, size = 0x4, offset = 0x4, fixed_abs, tag = 'smem constant byte address 0x4 - core index']
  #allocation1 [shape = 'u32[144,128]{1,0:T(1,128)}', space=vmem, size = 0x12000, scoped, tag = 'internal scratch']
  %s0 = inlined_call_operand.vmem [shape: f32[8,32], index: 0, kind: input, shape index: {}]
  %s1 = inlined_call_operand.hbm [shape: f32[8,32], index: 1, kind: input, shape index: {}]
  %s2 = inlined_call_operand.vmem [shape: s32[8,1], index: 2, kind: input, shape index: {}]
  %s3 = inlined_call_operand.vmem [shape: s32[1,8], index: 3, kind: input, shape index: {}]
  %s4 = inlined_call_operand.vmem [shape: f32[8,1], index: 4, kind: output, shape index: {}]
  %s5 = sld [smem:[#allocation0]]
  $region30: #{tpu_custom_call.1} parent=0
    _
  %s7 = ssub.s32 1, %s5
  %s8 = scalar_select 0, %s7, %s5
  $region1: #{tpu_custom_call.1} parent=0
    #allocation2 [shape = 'u8[4096]{0}', space=vmem, size = 0x1000, scoped, tag = 'input window, operand 1, single buffered']
    #allocation3 [shape = 's32[1]{0}', space=sflag, size = 0x4, scoped, tag = 'scoped memory for tpu_custom_call.1']
    %9 = vsyncpa [#allocation3], 0
    // Predicated region
    $region2: #{tpu_custom_call.1} parent=1 // pred_check
      _
    $region3: #{tpu_custom_call.1} parent=1 // pred_check_branch
      %11 = sbr.rel (0) target = $region5
    $region4: #{tpu_custom_call.1} parent=1 // pred_region
      _
    $region5: #{tpu_custom_call.1} parent=1 // pred_fallthru
      _
    // Predicated region
    $region6: #{tpu_custom_call.1} parent=1 // pred_check
      _
    $region7: #{tpu_custom_call.1} parent=1 // pred_check_branch
      %13 = sbr.rel (0) target = $region9
    $region8: #{tpu_custom_call.1} parent=1 // pred_region
      %s15 = ssub.s32 128, 128
      %16 = vsyncadd [#allocation3], %s15
      %s18 = sshll.u32 [#allocation2], 4
      %s19 = int_to_ptr.vmem [resolvable:$true] %s18
      %21 = dma.hbm_to_vmem [thread:$0]  %s1, 128, %s19, [#allocation3]
    $region9: #{tpu_custom_call.1} parent=1 // pred_fallthru
      _
    // Predicated region
    $region10: #{tpu_custom_call.1} parent=1 // pred_check
      _
    $region11: #{tpu_custom_call.1} parent=1 // pred_check_branch
      %23 = sbr.rel (0) target = $region13
    $region12: #{tpu_custom_call.1} parent=1 // pred_region
      _
    $region13: #{tpu_custom_call.1} parent=1 // pred_fallthru
      _
    // Predicated region
    $region14: #{tpu_custom_call.1} parent=1 // pred_check
      _
    $region15: #{tpu_custom_call.1} parent=1 // pred_check_branch
      %25 = sbr.rel (0) target = $region17
    $region16: #{tpu_custom_call.1} parent=1 // pred_region
      _
    $region17: #{tpu_custom_call.1} parent=1 // pred_fallthru
      _
    // Predicated region
    $region18: #{tpu_custom_call.1} parent=1 // pred_check
      _
    $region19: #{tpu_custom_call.1} parent=1 // pred_check_branch
      %27 = sbr.rel (0) target = $region21
    $region20: #{tpu_custom_call.1} parent=1 // pred_region
      %28 = dma.done [#allocation3], 128
    $region21: #{tpu_custom_call.1} parent=1 // pred_fallthru
      _
    %v29 = vld [vmem:[%s0] sm:$0xff]
    %v30 = vld [vmem:[#allocation2] sm:$0xff]
    %vm31 = vcmask 261120
    %v33 = vsel %vm31, %v29, 0
    %v36 = vsel %vm31, %v30, 0
    %38 = vmatprep.subr.mxu0 0.0
    %39 = vmatpush1.xpose.msra.mxu0 %v36
    %40 = vmatprep.subr.mxu0 0.0
    %41 = vmatpush1.xpose.msra.mxu0 0.0
    %42 = vmatprep.subr.mxu0 0.0
    %43 = vmatpush1.xpose.msra.mxu0 0.0
    %44 = vmatprep.subr.mxu0 0.0
    %45 = vmatpush1.xpose.msra.mxu0 0.0
    %46 = vmatprep.subr.mxu0 0.0
    %47 = vmatpush1.xpose.msra.mxu0 0.0
    %48 = vmatprep.subr.mxu0 0.0
    %49 = vmatpush1.xpose.msra.mxu0 0.0
    %50 = vmatprep.subr.mxu0 0.0
    %51 = vmatpush1.xpose.msra.mxu0 0.0
    %52 = vmatprep.subr.mxu0 0.0
    %53 = vmatpush1.xpose.msra.mxu0 0.0
    %54 = vmatprep.subr.mxu0 0.0
    %55 = vmatpush1.xpose.msra.mxu0 0.0
    %56 = vmatprep.subr.mxu0 0.0
    %57 = vmatpush1.xpose.msra.mxu0 0.0
    %58 = vmatprep.subr.mxu0 0.0
    %59 = vmatpush1.xpose.msra.mxu0 0.0
    %60 = vmatprep.subr.mxu0 0.0
    %61 = vmatpush1.xpose.msra.mxu0 0.0
    %62 = vmatprep.subr.mxu0 0.0
    %63 = vmatpush1.xpose.msra.mxu0 0.0
    %64 = vmatprep.subr.mxu0 0.0
    %65 = vmatpush1.xpose.msra.mxu0 0.0
    %66 = vmatprep.subr.mxu0 0.0
    %67 = vmatpush1.xpose.msra.mxu0 0.0
    %68 = vmatprep.subr.mxu0 0.0
    %69 = vmatpush1.xpose.msra.mxu0 0.0
    %70 = vmatprep.subr.mxu0 0.0
    %71 = vmatpush1.xpose.msra.mxu0 0.0
    %72 = vmatprep.subr.mxu0 0.0
    %73 = vmatpush1.xpose.msra.mxu0 0.0
    %74 = vmatprep.subr.mxu0 0.0
    %75 = vmatpush1.xpose.msra.mxu0 0.0
    %76 = vmatprep.subr.mxu0 0.0
    %77 = vmatpush1.xpose.msra.mxu0 0.0
    %78 = vmatprep.subr.mxu0 0.0
    %79 = vmatpush1.xpose.msra.mxu0 0.0
    %80 = vmatprep.subr.mxu0 0.0
    %81 = vmatpush1.xpose.msra.mxu0 0.0
    %82 = vmatprep.subr.mxu0 0.0
    %83 = vmatpush1.xpose.msra.mxu0 0.0
    %84 = vmatprep.subr.mxu0 0.0
    %85 = vmatpush1.xpose.msra.mxu0 0.0
    %86 = vmatprep.subr.mxu0 0.0
    %87 = vmatpush1.xpose.msra.mxu0 0.0
    %88 = vmatprep.subr.mxu0 0.0
    %89 = vmatpush1.xpose.msra.mxu0 0.0
    %90 = vmatprep.subr.mxu0 0.0
    %91 = vmatpush1.xpose.msra.mxu0 0.0
    %92 = vmatprep.subr.mxu0 0.0
    %93 = vmatpush1.xpose.msra.mxu0 0.0
    %94 = vmatprep.subr.mxu0 0.0
    %95 = vmatpush1.xpose.msra.mxu0 0.0
    %96 = vmatprep.subr.mxu0 0.0
    %97 = vmatpush1.xpose.msra.mxu0 0.0
    %98 = vmatprep.subr.mxu0 0.0
    %99 = vmatpush1.xpose.msra.mxu0 0.0
    %100 = vmatprep.subr.mxu0 0.0
    %101 = vmatpush1.xpose.msra.mxu0 0.0
    %102 = vmatprep.mubr.f32.mxu0 0.0
    %103 = vmatmul.mubr.f32.gmra.mrb[0].mxu0 %v33
    %v104 = vpop.f32.mrb[0].mxu0
    %v105 = vadd.f32 0.0, %v104
    %v106 = vpop.f32.mrb[0].mxu0
    %107 = vdwg.mxu0
    %v108 = vsel %vm31, %v30, 0.0
    %v109 = vrot.slane %v108, 4
    %v110 = vadd.f32 %v108, %v109
    %v111 = vrot.slane %v110, 2
    %v112 = vadd.f32 %v110, %v111
    %v113 = vrot.slane %v112, 1
    %v114 = vadd.f32 %v112, %v113
    %v115 = vmul.f32 %v114, %v114
    %v116 = vsel %vm31, %v115, 0.0
    %117 = vadd.xlane.f32.xlu0 %v116
    %v118 = vpop.xlane.xlu0 %117
    %s119 = vtos %v118
    %v120 = vmul.f32 %v30, %v30
    %v121 = vsel %vm31, %v120, 0.0
    %122 = vadd.xlane.f32.xlu0 %v121
    %v123 = vpop.xlane.xlu0 %122
    %v124 = vrot.slane %v123, 4
    %v125 = vadd.f32 %v123, %v124
    %v126 = vrot.slane %v125, 2
    %v127 = vadd.f32 %v125, %v126
    %v128 = vrot.slane %v127, 1
    %v129 = vadd.f32 %v127, %v128
    %s130 = vtos %v129
    %s131 = ssub.f32 %s119, %s130
    %s132 = smul.f32 %s131, 0.017857144
    %v133 = vld [vmem:[%s2] sm:$0xff]
    %v134 = vld [vmem:[%s3] sm:$0x1]
    %135 = vset.pattern.permute.xlu0 0
    %136 = vperm.xlu0 %135, %v133
    %v137 = vpop.permute.xlu0 %136
    %v138 = vlaneseq
    %v139 = vshrl.u32 %v138, 7
    %v140 = vsub.s32 0, %v139
    %v141 = vrot.slane %v134, %v140
    %vm142 = vcmp.eq.s32.totalorder %v137, %v141
    %s143 = smul.u32 0, 8
    %v144 = vlaneseq
    %v145 = vshrl.u32 %v144, 7
    %v146 = vstv %s143
    %v147 = vadd.s32 %v146, %v145
    %v148 = vlaneseq
    %v149 = vand.u32 %v148, 127
    %vm150 = vcmp.eq.s32.totalorder %v147, %v149
    %v151 = vstv %s132
    %v152 = vsub.f32 %v105, %v151
    %vm153 = vmxor %vm150, 1
    %vm154 = vmand %vm142, %vm153
    %v155 = vmul.f32 %v152, -1.0
    %v156 = vmul.f32 %v155, 1.442695
    %v157 = vpow.pop %v156
    %v158 = vsel %vm154, %v157, 0.0
    %vm159 = vcmask 64512
    %v160 = vsel %vm159, %v158, 0.0
    %161 = vadd.xlane.f32.xlu0 %v160
    %v162 = vpop.xlane.xlu0 %161
    %vm163 = vmxor %vm142, 1
    %v164 = vmul.f32 %v152, 5.0
    %v165 = vmul.f32 %v164, 1.442695
    %v166 = vpow.pop %v165
    %v167 = vsel %vm163, %v166, 0.0
    %v168 = vsel %vm159, %v167, 0.0
    %169 = vadd.xlane.f32.xlu0 %v168
    %v170 = vpop.xlane.xlu0 %169
    %v171 = vadd.f32 %v162, 1.0
    %v172 = vlog2.pop %v171
    %v173 = vmul.f32 %v172, 0.6931472
    %v174 = vmul.f32 -0.5, %v162
    %v175 = vadd.f32 %v174, 1.0
    %v176 = vmul.f32 %v175, %v162
    %v177 = vand.u32 2147483647, %v162
    %vm178 = vcmp.lt.f32.partialorder %v177, 0.0004427343
    %v179 = vsel %vm178, %v176, %v173
    %v180 = vadd.f32 %v170, 1.0
    %v181 = vlog2.pop %v180
    %v182 = vmul.f32 %v181, 0.6931472
    %v183 = vmul.f32 -0.5, %v170
    %v184 = vadd.f32 %v183, 1.0
    %v185 = vmul.f32 %v184, %v170
    %v186 = vand.u32 2147483647, %v170
    %vm187 = vcmp.lt.f32.partialorder %v186, 0.0004427343
    %v188 = vsel %vm187, %v185, %v182
    %v189 = vmul.f32 %v188, 0.2
    %v190 = vadd.f32 %v179, %v189
    %vm191 = vcmask 7168
    %192 = vst.msk [vmem:[%s4] sm:$0xff] %vm191, %v190
    // Predicated region
    $region22: #{tpu_custom_call.1} parent=1 // pred_check
      _
    $region23: #{tpu_custom_call.1} parent=1 // pred_check_branch
      %194 = sbr.rel (0) target = $region25
    $region24: #{tpu_custom_call.1} parent=1 // pred_region
      _
    $region25: #{tpu_custom_call.1} parent=1 // pred_fallthru
      _
    // Predicated region
    $region26: #{tpu_custom_call.1} parent=1 // pred_check
      _
    $region27: #{tpu_custom_call.1} parent=1 // pred_check_branch
      %196 = sbr.rel (0) target = $region29
    $region28: #{tpu_custom_call.1} parent=1 // pred_region
      _
    $region29: #{tpu_custom_call.1} parent=1 // pred_fallthru
      _
    %197 = vsyncpa [#allocation3], 1

</llo_original>
